<compile_context>
chip_gen: v6e
topology: v6e:2x2x1
jax: 0.10.0
libtpu: 0.0.40
codegen_flags: <defaults>
</compile_context>

<pallas_src>
import functools
import math

import jax
import jax.numpy as jnp
from jax.experimental import pallas as pl
from jax.experimental.pallas import tpu as pltpu

LANE = 128


def _round_up(x, m):
    return ((x + m - 1) // m) * m


# ---------------------------------------------------------------------------
# Kernels
# ---------------------------------------------------------------------------
def _sage_layer_kernel(a_ref, xk_ref, xtile_ref, w_ref, b_ref, h_ref, acc_ref):
    """One SAGEConv layer (mean aggregation folded into A) + ReLU.

    Accumulates agg = A_tile @ X over the K grid axis, then at the last K step:
      h_tile = relu( concat([agg, X_tile]) @ [Wl ; Wr] + b )
    """
    k = pl.program_id(1)

    @pl.when(k == 0)
    def _():
        acc_ref[...] = jnp.zeros_like(acc_ref)

    acc_ref[...] += jnp.dot(a_ref[...], xk_ref[...],
                            preferred_element_type=jnp.float32)

    @pl.when(k == pl.num_programs(1) - 1)
    def _():
        cat = jnp.concatenate(
            [acc_ref[...].astype(jnp.bfloat16), xtile_ref[...]], axis=-1)
        h = jnp.dot(cat, w_ref[...], preferred_element_type=jnp.float32)
        h = jnp.maximum(h + b_ref[...], 0.0)          # f32 epilogue
        h_ref[...] = h.astype(h_ref.dtype)


def _sage_layer_fc_kernel(a_ref, hk_ref, htile_ref, w_ref, b_ref,
                          wfc_ref, bfc_ref, out_ref, acc_ref):
    """Second SAGEConv layer + ReLU + final Linear (lane-padded output)."""
    k = pl.program_id(1)

    @pl.when(k == 0)
    def _():
        acc_ref[...] = jnp.zeros_like(acc_ref)

    acc_ref[...] += jnp.dot(a_ref[...], hk_ref[...],
                            preferred_element_type=jnp.float32)

    @pl.when(k == pl.num_programs(1) - 1)
    def _():
        cat = jnp.concatenate(
            [acc_ref[...].astype(jnp.bfloat16), htile_ref[...]], axis=-1)
        h2 = jnp.dot(cat, w_ref[...], preferred_element_type=jnp.float32)
        h2 = jnp.maximum(h2 + b_ref[...], 0.0)        # f32 epilogue
        out = jnp.dot(h2.astype(jnp.bfloat16), wfc_ref[...],
                      preferred_element_type=jnp.float32) + bfc_ref[...]
        out_ref[...] = out.astype(out_ref.dtype)      # (tm, 128) lane-dense


# ---------------------------------------------------------------------------
# Host wrapper
# ---------------------------------------------------------------------------
def _const_spec(shape):
    return pl.BlockSpec(shape, lambda i, k: (0,) * len(shape))


def _row_spec(tm, cols):
    return pl.BlockSpec((tm, cols), lambda i, k: (i, 0))


def _kcol_spec(tk, cols):
    return pl.BlockSpec((tk, cols), lambda i, k: (k, 0))


def _a_spec(tm, tk):
    return pl.BlockSpec((tm, tk), lambda i, k: (i, k))


def _choose_tiles(n, tm, tk):
    """Returns (row tile, reduction/column tile, padded node count)."""
    small = _round_up(n, 8)
    if small <= tm:
        # Whole graph fits in one row tile: full-extent blocks on both axes.
        return small, small, small
    tm_eff = _round_up(min(tm, small), 8)          # sublane-aligned row tile
    tk_eff = _round_up(min(tk, small), LANE)       # lane-aligned reduction tile
    lcm = tm_eff * tk_eff // math.gcd(tm_eff, tk_eff)
    return tm_eff, tk_eff, _round_up(n, lcm)


@functools.partial(jax.jit, static_argnames=("tm", "tk"))
def gqnn_forward(a_mean, x, params, *, tm=256, tk=512):
    """a_mean: (N, N) dense mean-aggregation matrix; x: (N, in_dim) f32."""
    n, in_dim = x.shape
    hidden = params["w1l"].shape[1]

    fp = _round_up(in_dim, LANE)          # padded input feature dim
    hp = _round_up(hidden, LANE)          # padded hidden dim
    op = LANE                             # lane-dense padded output width (>= 2)

    tm_eff, tk_eff, npad = _choose_tiles(n, tm, tk)
    grid = (npad // tm_eff, npad // tk_eff)

    f32, bf16 = jnp.float32, jnp.bfloat16

    # ---- pad + cast operands: bf16 for matmul inputs, f32 for biases ----
    a_p = jnp.zeros((npad, npad), bf16).at[:n, :n].set(a_mean.astype(bf16))
    x_p = jnp.zeros((npad, fp), bf16).at[:n, :in_dim].set(x.astype(bf16))

    def pad_w(w, r, c):
        return jnp.zeros((r, c), bf16).at[:w.shape[0], :w.shape[1]].set(
            w.astype(bf16))

    w1 = jnp.concatenate([pad_w(params["w1l"], fp, hp),
                          pad_w(params["w1r"], fp, hp)], axis=0)   # (2Fp, Hp)
    w2 = jnp.concatenate([pad_w(params["w2l"], hp, hp),
                          pad_w(params["w2r"], hp, hp)], axis=0)   # (2Hp, Hp)
    wfc = pad_w(params["wfc"], hp, op)                             # (Hp, 128)

    b1 = jnp.zeros((1, hp), f32).at[:, :hidden].set(
        params["b1"].reshape(1, -1).astype(f32))
    b2 = jnp.zeros((1, hp), f32).at[:, :hidden].set(
        params["b2"].reshape(1, -1).astype(f32))
    bfc = jnp.zeros((1, op), f32).at[:, :2].set(
        params["bfc"].reshape(1, -1).astype(f32))

    cparams = pltpu.CompilerParams(
        dimension_semantics=("parallel", "arbitrary"),   # rows megacore-sharded
        vmem_limit_bytes=48 * 1024 * 1024,               # safe on v5e/v6e/v7x
    )

    # ---------------- layer 1: h1 = relu(SAGE1(x)) ----------------
    cost1 = pl.CostEstimate(
        flops=2 * npad * npad * fp + 2 * npad * (2 * fp) * hp,
        transcendentals=0,
        bytes_accessed=2 * (npad * npad + 2 * npad * fp + 2 * fp * hp
                            + npad * hp),
    )
    h1 = pl.pallas_call(
        _sage_layer_kernel,
        out_shape=jax.ShapeDtypeStruct((npad, hp), bf16),
        grid=grid,
        in_specs=[
            _a_spec(tm_eff, tk_eff),      # A tile           (tm, tk)
            _kcol_spec(tk_eff, fp),       # X k-slab         (tk, Fp)
            _row_spec(tm_eff, fp),        # X row tile       (tm, Fp)
            _const_spec((2 * fp, hp)),    # [W1l ; W1r]      (2Fp, Hp)
            _const_spec((1, hp)),         # b1
        ],
        out_specs=_row_spec(tm_eff, hp),
        scratch_shapes=[pltpu.VMEM((tm_eff, fp), f32)],
        compiler_params=cparams,
        cost_estimate=cost1,
    )(a_p, x_p, x_p, w1, b1)

    # ---------------- layer 2 + fc: out = fc(relu(SAGE2(h1))) ----------------
    cost2 = pl.CostEstimate(
        flops=(2 * npad * npad * hp + 2 * npad * (2 * hp) * hp
               + 2 * npad * hp * op),
        transcendentals=0,
        bytes_accessed=2 * (npad * npad + 2 * npad * hp + 2 * hp * hp
                            + hp * op) + 4 * npad * op,
    )
    out_p = pl.pallas_call(
        _sage_layer_fc_kernel,
        out_shape=jax.ShapeDtypeStruct((npad, op), f32),
        grid=grid,
        in_specs=[
            _a_spec(tm_eff, tk_eff),      # A tile           (tm, tk)
            _kcol_spec(tk_eff, hp),       # h1 k-slab        (tk, Hp)
            _row_spec(tm_eff, hp),        # h1 row tile      (tm, Hp)
            _const_spec((2 * hp, hp)),    # [W2l ; W2r]      (2Hp, Hp)
            _const_spec((1, hp)),         # b2
            _const_spec((hp, op)),        # Wfc padded       (Hp, 128)
            _const_spec((1, op)),         # bfc padded
        ],
        out_specs=_row_spec(tm_eff, op),
        scratch_shapes=[pltpu.VMEM((tm_eff, hp), f32)],
        compiler_params=cparams,
        cost_estimate=cost2,
    )(a_p, h1, h1, w2, b2, wfc, bfc)

    return out_p[:n, :2]


# ---------------------------------------------------------------------------
# Graph glue / params / reference
# ---------------------------------------------------------------------------
def build_mean_adjacency(edge_index, num_nodes):
    """Dense equivalent of PyG scatter-mean aggregation over incoming edges.

    edge_index: (2, E) int32, row 0 = source j, row 1 = target i (edge j -> i).
    A[i, j] = (#edges j->i) / deg_in(i); isolated-node rows are all zero.
    """
    src = edge_index[0]
    dst = edge_index[1]
    adj = jnp.zeros((num_nodes, num_nodes), jnp.float32).at[dst, src].add(1.0)
    deg = jnp.clip(jnp.sum(adj, axis=1, keepdims=True), 1.0, None)
    return adj / deg


def init_params(key, in_dim, hidden_dim):
    """Deterministic synthetic parameters, (in, out) layout for right-mult."""
    ks = jax.random.split(key, 5)
    s1 = 1.0 / jnp.sqrt(in_dim)
    s2 = 1.0 / jnp.sqrt(hidden_dim)
    return {
        "w1l": jax.random.uniform(ks[0], (in_dim, hidden_dim), jnp.float32, -s1, s1),
        "w1r": jax.random.uniform(ks[1], (in_dim, hidden_dim), jnp.float32, -s1, s1),
        "b1": jnp.zeros((1, hidden_dim), jnp.float32),
        "w2l": jax.random.uniform(ks[2], (hidden_dim, hidden_dim), jnp.float32, -s2, s2),
        "w2r": jax.random.uniform(ks[3], (hidden_dim, hidden_dim), jnp.float32, -s2, s2),
        "b2": jnp.zeros((1, hidden_dim), jnp.float32),
        "wfc": jax.random.uniform(ks[4], (hidden_dim, 2), jnp.float32, -s2, s2),
        "bfc": jnp.zeros((1, 2), jnp.float32),
    }


def reference_forward(a_mean, x, p, quantize=False):
    """Pure-JAX reference. quantize=True mirrors the kernel's bf16 casts
    (math kept in f32) for a tight numerical comparison."""
    if quantize:
        cast = lambda t: t.astype(jnp.bfloat16).astype(jnp.float32)
    else:
        cast = lambda t: t
    a, xq = cast(a_mean), cast(x)
    agg1 = cast(a @ xq)
    h1 = jnp.maximum(agg1 @ cast(p["w1l"]) + xq @ cast(p["w1r"]) + p["b1"], 0.0)
    h1q = cast(h1)
    agg2 = cast(a @ h1q)
    h2 = jnp.maximum(agg2 @ cast(p["w2l"]) + h1q @ cast(p["w2r"]) + p["b2"], 0.0)
    h2q = cast(h2)
    return h2q @ cast(p["wfc"]) + p["bfc"]


if __name__ == "__main__":
    key = jax.random.PRNGKey(0)

    def run_case(n, in_dim, hidden, e, tm, tk, case_key):
        kx, ke, kp = jax.random.split(case_key, 3)
        x = jax.random.normal(kx, (n, in_dim), jnp.float32)
        edge_index = jax.random.randint(ke, (2, e), 0, n, jnp.int32)
        params = init_params(kp, in_dim, hidden)
        a_mean = build_mean_adjacency(edge_index, n)      # plain-JAX glue

        out = jax.block_until_ready(gqnn_forward(a_mean, x, params, tm=tm, tk=tk))
        assert out.shape == (n, 2), out.shape

        ref_q = reference_forward(a_mean, x, params, quantize=True)
        err = float(jnp.max(jnp.abs(out - ref_q)))
        assert jnp.allclose(out, ref_q, atol=3e-2, rtol=3e-2), (
            f"mismatch vs reference (n={n}), max abs diff = {err}")

    k1, k2 = jax.random.split(key)
    # Tiny graph: single-tile path (grid (1, 1)).
    run_case(n=8, in_dim=16, hidden=32, e=20, tm=256, tk=512, case_key=k1)
    # Larger graph with forced tiling: multi row-tile + multi K-tile path.
    run_case(n=200, in_dim=16, hidden=32, e=600, tm=64, tk=128, case_key=k2)

    print("KERNEL_OK")
</pallas_src>

<mosaic_0001>
module attributes {stable_mosaic.version = 11 : i64} {
  func.func @_sage_layer_kernel(%arg0: i32, %arg1: i32, %arg2: memref<8x8xbf16, #tpu.memory_space<vmem>>, %arg3: memref<8x128xbf16, #tpu.memory_space<vmem>>, %arg4: memref<8x128xbf16, #tpu.memory_space<vmem>>, %arg5: memref<256x128xbf16, #tpu.memory_space<vmem>>, %arg6: memref<1x128xf32, #tpu.memory_space<vmem>>, %arg7: memref<8x128xbf16, #tpu.memory_space<vmem>>, %arg8: memref<8x128xf32, #tpu.memory_space<vmem>>) attributes {dimension_semantics = [#tpu.dimension_semantics<parallel>, #tpu.dimension_semantics<arbitrary>], iteration_bounds = array<i64: 1, 1>, scalar_prefetch = 0 : i64, scratch_operands = 1 : i64, tpu.core_type = #tpu.core_type<tc>, window_params = [{transform_indices = @transform_0, window_bounds = array<i64: 8, 8>}, {transform_indices = @transform_1, window_bounds = array<i64: 8, 128>}, {transform_indices = @transform_2, window_bounds = array<i64: 8, 128>}, {pipeline_mode = #tpu.pipeline_mode<synchronous>, transform_indices = @transform_3, window_bounds = array<i64: 256, 128>}, {pipeline_mode = #tpu.pipeline_mode<synchronous>, transform_indices = @transform_4, window_bounds = array<i64: 1, 128>}, {transform_indices = @transform_5, window_bounds = array<i64: 8, 128>}]} {
    %c0_i32 = arith.constant 0 : i32
    %0 = arith.cmpi eq, %arg1, %c0_i32 : i32
    %1 = arith.extui %0 : i1 to i32
    %c0_i32_0 = arith.constant 0 : i32
    %2 = arith.cmpi ne, %1, %c0_i32_0 : i32
    scf.if %2 {
      %cst_10 = arith.constant 0.000000e+00 : f32
      %12 = vector.broadcast %cst_10 : f32 to vector<8x128xf32>
      %c0_11 = arith.constant 0 : index
      %c0_12 = arith.constant 0 : index
      %13 = vector.load %arg8[%c0_11, %c0_12] : memref<8x128xf32, #tpu.memory_space<vmem>>, vector<8x128xf32>
      tpu.vector_store %arg8[%c0_11, %c0_12], %12 {strides = array<i32>} : memref<8x128xf32, #tpu.memory_space<vmem>>, vector<8x128xf32>,
    } else {
    }
    %c0 = arith.constant 0 : index
    %c0_1 = arith.constant 0 : index
    %3 = vector.load %arg8[%c0, %c0_1] : memref<8x128xf32, #tpu.memory_space<vmem>>, vector<8x128xf32>
    %c0_2 = arith.constant 0 : index
    %c0_3 = arith.constant 0 : index
    %4 = vector.load %arg2[%c0_2, %c0_3] : memref<8x8xbf16, #tpu.memory_space<vmem>>, vector<8x8xbf16>
    %c0_4 = arith.constant 0 : index
    %c0_5 = arith.constant 0 : index
    %5 = vector.load %arg3[%c0_4, %c0_5] : memref<8x128xbf16, #tpu.memory_space<vmem>>, vector<8x128xbf16>
    %cst = arith.constant dense<0.000000e+00> : vector<8x128xf32>
    %6 = tpu.matmul %4, %5, %cst {dimension_numbers = #tpu.dot_dimension_numbers<[1], [0], [0], [1], [0, 0, 1, 1], [], []>} : vector<8x8xbf16>, vector<8x128xbf16>, vector<8x128xf32> -> vector<8x128xf32>
    %7 = arith.addf %3, %6 : vector<8x128xf32>
    %c0_6 = arith.constant 0 : index
    %c0_7 = arith.constant 0 : index
    %8 = vector.load %arg8[%c0_6, %c0_7] : memref<8x128xf32, #tpu.memory_space<vmem>>, vector<8x128xf32>
    tpu.vector_store %arg8[%c0_6, %c0_7], %7 {strides = array<i32>} : memref<8x128xf32, #tpu.memory_space<vmem>>, vector<8x128xf32>,
    %c0_i32_8 = arith.constant 0 : i32
    %9 = arith.cmpi eq, %arg1, %c0_i32_8 : i32
    %10 = arith.extui %9 : i1 to i32
    %c0_i32_9 = arith.constant 0 : i32
    %11 = arith.cmpi ne, %10, %c0_i32_9 : i32
    scf.if %11 {
      %c0_10 = arith.constant 0 : index
      %c0_11 = arith.constant 0 : index
      %12 = vector.load %arg8[%c0_10, %c0_11] : memref<8x128xf32, #tpu.memory_space<vmem>>, vector<8x128xf32>
      %13 = arith.truncf %12 : vector<8x128xf32> to vector<8x128xbf16>
      %c0_12 = arith.constant 0 : index
      %c0_13 = arith.constant 0 : index
      %14 = vector.load %arg4[%c0_12, %c0_13] : memref<8x128xbf16, #tpu.memory_space<vmem>>, vector<8x128xbf16>
      %15 = tpu.concatenate %13, %14 in 1 : vector<8x128xbf16>, vector<8x128xbf16> -> vector<8x256xbf16>
      %c0_14 = arith.constant 0 : index
      %c0_15 = arith.constant 0 : index
      %16 = vector.load %arg5[%c0_14, %c0_15] : memref<256x128xbf16, #tpu.memory_space<vmem>>, vector<256x128xbf16>
      %cst_16 = arith.constant dense<0.000000e+00> : vector<8x128xf32>
      %17 = tpu.matmul %15, %16, %cst_16 {dimension_numbers = #tpu.dot_dimension_numbers<[1], [0], [0], [1], [0, 0, 1, 1], [], []>} : vector<8x256xbf16>, vector<256x128xbf16>, vector<8x128xf32> -> vector<8x128xf32>
      %c0_17 = arith.constant 0 : index
      %c0_18 = arith.constant 0 : index
      %18 = vector.load %arg6[%c0_17, %c0_18] : memref<1x128xf32, #tpu.memory_space<vmem>>, vector<1x128xf32>
      %19 = vector.broadcast %18 : vector<1x128xf32> to vector<8x128xf32>
      %20 = arith.addf %17, %19 : vector<8x128xf32>
      %cst_19 = arith.constant 0.000000e+00 : f32
      %21 = vector.broadcast %cst_19 : f32 to vector<8x128xf32>
      %22 = arith.maximumf %20, %21 : vector<8x128xf32>
      %23 = arith.truncf %22 : vector<8x128xf32> to vector<8x128xbf16>
      %c0_20 = arith.constant 0 : index
      %c0_21 = arith.constant 0 : index
      %24 = vector.load %arg7[%c0_20, %c0_21] : memref<8x128xbf16, #tpu.memory_space<vmem>>, vector<8x128xbf16>
      tpu.vector_store %arg7[%c0_20, %c0_21], %23 {strides = array<i32>} : memref<8x128xbf16, #tpu.memory_space<vmem>>, vector<8x128xbf16>,
    } else {
    }
    return
  }
  func.func @transform_0(%arg0: i32, %arg1: i32) -> (i32, i32) {
    %c0_i32 = arith.constant 0 : i32
    return %arg0, %arg1 : i32, i32
  }
  func.func @transform_1(%arg0: i32, %arg1: i32) -> (i32, i32) {
    %c0_i32 = arith.constant 0 : i32
    %c0_i32_0 = arith.constant 0 : i32
    return %arg1, %c0_i32 : i32, i32
  }
  func.func @transform_2(%arg0: i32, %arg1: i32) -> (i32, i32) {
    %c0_i32 = arith.constant 0 : i32
    %c0_i32_0 = arith.constant 0 : i32
    return %arg0, %c0_i32 : i32, i32
  }
  func.func @transform_3(%arg0: i32, %arg1: i32) -> (i32, i32) {
    %c0_i32 = arith.constant 0 : i32
    %c0_i32_0 = arith.constant 0 : i32
    %c0_i32_1 = arith.constant 0 : i32
    return %c0_i32, %c0_i32_0 : i32, i32
  }
  func.func @transform_4(%arg0: i32, %arg1: i32) -> (i32, i32) {
    %c0_i32 = arith.constant 0 : i32
    %c0_i32_0 = arith.constant 0 : i32
    %c0_i32_1 = arith.constant 0 : i32
    return %c0_i32, %c0_i32_0 : i32, i32
  }
  func.func @transform_5(%arg0: i32, %arg1: i32) -> (i32, i32) {
    %c0_i32 = arith.constant 0 : i32
    %c0_i32_0 = arith.constant 0 : i32
    return %arg0, %c0_i32 : i32, i32
  }
}

module attributes {stable_mosaic.version = 11 : i64} {
  func.func @_sage_layer_fc_kernel(%arg0: i32, %arg1: i32, %arg2: memref<8x8xbf16, #tpu.memory_space<vmem>>, %arg3: memref<8x128xbf16, #tpu.memory_space<vmem>>, %arg4: memref<8x128xbf16, #tpu.memory_space<vmem>>, %arg5: memref<256x128xbf16, #tpu.memory_space<vmem>>, %arg6: memref<1x128xf32, #tpu.memory_space<vmem>>, %arg7: memref<128x128xbf16, #tpu.memory_space<vmem>>, %arg8: memref<1x128xf32, #tpu.memory_space<vmem>>, %arg9: memref<8x128xf32, #tpu.memory_space<vmem>>, %arg10: memref<8x128xf32, #tpu.memory_space<vmem>>) attributes {dimension_semantics = [#tpu.dimension_semantics<parallel>, #tpu.dimension_semantics<arbitrary>], iteration_bounds = array<i64: 1, 1>, scalar_prefetch = 0 : i64, scratch_operands = 1 : i64, tpu.core_type = #tpu.core_type<tc>, window_params = [{transform_indices = @transform_0, window_bounds = array<i64: 8, 8>}, {transform_indices = @transform_1, window_bounds = array<i64: 8, 128>}, {transform_indices = @transform_2, window_bounds = array<i64: 8, 128>}, {pipeline_mode = #tpu.pipeline_mode<synchronous>, transform_indices = @transform_3, window_bounds = array<i64: 256, 128>}, {pipeline_mode = #tpu.pipeline_mode<synchronous>, transform_indices = @transform_4, window_bounds = array<i64: 1, 128>}, {pipeline_mode = #tpu.pipeline_mode<synchronous>, transform_indices = @transform_5, window_bounds = array<i64: 128, 128>}, {pipeline_mode = #tpu.pipeline_mode<synchronous>, transform_indices = @transform_6, window_bounds = array<i64: 1, 128>}, {transform_indices = @transform_7, window_bounds = array<i64: 8, 128>}]} {
    %c0_i32 = arith.constant 0 : i32
    %0 = arith.cmpi eq, %arg1, %c0_i32 : i32
    %1 = arith.extui %0 : i1 to i32
    %c0_i32_0 = arith.constant 0 : i32
    %2 = arith.cmpi ne, %1, %c0_i32_0 : i32
    scf.if %2 {
      %cst_10 = arith.constant 0.000000e+00 : f32
      %12 = vector.broadcast %cst_10 : f32 to vector<8x128xf32>
      %c0_11 = arith.constant 0 : index
      %c0_12 = arith.constant 0 : index
      %13 = vector.load %arg10[%c0_11, %c0_12] : memref<8x128xf32, #tpu.memory_space<vmem>>, vector<8x128xf32>
      tpu.vector_store %arg10[%c0_11, %c0_12], %12 {strides = array<i32>} : memref<8x128xf32, #tpu.memory_space<vmem>>, vector<8x128xf32>,
    } else {
    }
    %c0 = arith.constant 0 : index
    %c0_1 = arith.constant 0 : index
    %3 = vector.load %arg10[%c0, %c0_1] : memref<8x128xf32, #tpu.memory_space<vmem>>, vector<8x128xf32>
    %c0_2 = arith.constant 0 : index
    %c0_3 = arith.constant 0 : index
    %4 = vector.load %arg2[%c0_2, %c0_3] : memref<8x8xbf16, #tpu.memory_space<vmem>>, vector<8x8xbf16>
    %c0_4 = arith.constant 0 : index
    %c0_5 = arith.constant 0 : index
    %5 = vector.load %arg3[%c0_4, %c0_5] : memref<8x128xbf16, #tpu.memory_space<vmem>>, vector<8x128xbf16>
    %cst = arith.constant dense<0.000000e+00> : vector<8x128xf32>
    %6 = tpu.matmul %4, %5, %cst {dimension_numbers = #tpu.dot_dimension_numbers<[1], [0], [0], [1], [0, 0, 1, 1], [], []>} : vector<8x8xbf16>, vector<8x128xbf16>, vector<8x128xf32> -> vector<8x128xf32>
    %7 = arith.addf %3, %6 : vector<8x128xf32>
    %c0_6 = arith.constant 0 : index
    %c0_7 = arith.constant 0 : index
    %8 = vector.load %arg10[%c0_6, %c0_7] : memref<8x128xf32, #tpu.memory_space<vmem>>, vector<8x128xf32>
    tpu.vector_store %arg10[%c0_6, %c0_7], %7 {strides = array<i32>} : memref<8x128xf32, #tpu.memory_space<vmem>>, vector<8x128xf32>,
    %c0_i32_8 = arith.constant 0 : i32
    %9 = arith.cmpi eq, %arg1, %c0_i32_8 : i32
    %10 = arith.extui %9 : i1 to i32
    %c0_i32_9 = arith.constant 0 : i32
    %11 = arith.cmpi ne, %10, %c0_i32_9 : i32
    scf.if %11 {
      %c0_10 = arith.constant 0 : index
      %c0_11 = arith.constant 0 : index
      %12 = vector.load %arg10[%c0_10, %c0_11] : memref<8x128xf32, #tpu.memory_space<vmem>>, vector<8x128xf32>
      %13 = arith.truncf %12 : vector<8x128xf32> to vector<8x128xbf16>
      %c0_12 = arith.constant 0 : index
      %c0_13 = arith.constant 0 : index
      %14 = vector.load %arg4[%c0_12, %c0_13] : memref<8x128xbf16, #tpu.memory_space<vmem>>, vector<8x128xbf16>
      %15 = tpu.concatenate %13, %14 in 1 : vector<8x128xbf16>, vector<8x128xbf16> -> vector<8x256xbf16>
      %c0_14 = arith.constant 0 : index
      %c0_15 = arith.constant 0 : index
      %16 = vector.load %arg5[%c0_14, %c0_15] : memref<256x128xbf16, #tpu.memory_space<vmem>>, vector<256x128xbf16>
      %cst_16 = arith.constant dense<0.000000e+00> : vector<8x128xf32>
      %17 = tpu.matmul %15, %16, %cst_16 {dimension_numbers = #tpu.dot_dimension_numbers<[1], [0], [0], [1], [0, 0, 1, 1], [], []>} : vector<8x256xbf16>, vector<256x128xbf16>, vector<8x128xf32> -> vector<8x128xf32>
      %c0_17 = arith.constant 0 : index
      %c0_18 = arith.constant 0 : index
      %18 = vector.load %arg6[%c0_17, %c0_18] : memref<1x128xf32, #tpu.memory_space<vmem>>, vector<1x128xf32>
      %19 = vector.broadcast %18 : vector<1x128xf32> to vector<8x128xf32>
      %20 = arith.addf %17, %19 : vector<8x128xf32>
      %cst_19 = arith.constant 0.000000e+00 : f32
      %21 = vector.broadcast %cst_19 : f32 to vector<8x128xf32>
      %22 = arith.maximumf %20, %21 : vector<8x128xf32>
      %23 = arith.truncf %22 : vector<8x128xf32> to vector<8x128xbf16>
      %c0_20 = arith.constant 0 : index
      %c0_21 = arith.constant 0 : index
      %24 = vector.load %arg7[%c0_20, %c0_21] : memref<128x128xbf16, #tpu.memory_space<vmem>>, vector<128x128xbf16>
      %cst_22 = arith.constant dense<0.000000e+00> : vector<8x128xf32>
      %25 = tpu.matmul %23, %24, %cst_22 {dimension_numbers = #tpu.dot_dimension_numbers<[1], [0], [0], [1], [0, 0, 1, 1], [], []>} : vector<8x128xbf16>, vector<128x128xbf16>, vector<8x128xf32> -> vector<8x128xf32>
      %c0_23 = arith.constant 0 : index
      %c0_24 = arith.constant 0 : index
      %26 = vector.load %arg8[%c0_23, %c0_24] : memref<1x128xf32, #tpu.memory_space<vmem>>, vector<1x128xf32>
      %27 = vector.broadcast %26 : vector<1x128xf32> to vector<8x128xf32>
      %28 = arith.addf %25, %27 : vector<8x128xf32>
      %c0_25 = arith.constant 0 : index
      %c0_26 = arith.constant 0 : index
      %29 = vector.load %arg9[%c0_25, %c0_26] : memref<8x128xf32, #tpu.memory_space<vmem>>, vector<8x128xf32>
      tpu.vector_store %arg9[%c0_25, %c0_26], %28 {strides = array<i32>} : memref<8x128xf32, #tpu.memory_space<vmem>>, vector<8x128xf32>,
    } else {
    }
    return
  }
  func.func @transform_0(%arg0: i32, %arg1: i32) -> (i32, i32) {
    %c0_i32 = arith.constant 0 : i32
    return %arg0, %arg1 : i32, i32
  }
  func.func @transform_1(%arg0: i32, %arg1: i32) -> (i32, i32) {
    %c0_i32 = arith.constant 0 : i32
    %c0_i32_0 = arith.constant 0 : i32
    return %arg1, %c0_i32 : i32, i32
  }
  func.func @transform_2(%arg0: i32, %arg1: i32) -> (i32, i32) {
    %c0_i32 = arith.constant 0 : i32
    %c0_i32_0 = arith.constant 0 : i32
    return %arg0, %c0_i32 : i32, i32
  }
  func.func @transform_3(%arg0: i32, %arg1: i32) -> (i32, i32) {
    %c0_i32 = arith.constant 0 : i32
    %c0_i32_0 = arith.constant 0 : i32
    %c0_i32_1 = arith.constant 0 : i32
    return %c0_i32, %c0_i32_0 : i32, i32
  }
  func.func @transform_4(%arg0: i32, %arg1: i32) -> (i32, i32) {
    %c0_i32 = arith.constant 0 : i32
    %c0_i32_0 = arith.constant 0 : i32
    %c0_i32_1 = arith.constant 0 : i32
    return %c0_i32, %c0_i32_0 : i32, i32
  }
  func.func @transform_5(%arg0: i32, %arg1: i32) -> (i32, i32) {
    %c0_i32 = arith.constant 0 : i32
    %c0_i32_0 = arith.constant 0 : i32
    %c0_i32_1 = arith.constant 0 : i32
    return %c0_i32, %c0_i32_0 : i32, i32
  }
  func.func @transform_6(%arg0: i32, %arg1: i32) -> (i32, i32) {
    %c0_i32 = arith.constant 0 : i32
    %c0_i32_0 = arith.constant 0 : i32
    %c0_i32_1 = arith.constant 0 : i32
    return %c0_i32, %c0_i32_0 : i32, i32
  }
  func.func @transform_7(%arg0: i32, %arg1: i32) -> (i32, i32) {
    %c0_i32 = arith.constant 0 : i32
    %c0_i32_0 = arith.constant 0 : i32
    return %arg0, %c0_i32 : i32, i32
  }
}

</mosaic_0001>

<llo_original>
// kernel: gqnn_forward.3
$region0: #{gqnn_forward.3}
  #allocation0 [shape = 'u32[]', space=smem, size = 0x4, offset = 0x4, fixed_abs, tag = 'smem constant byte address 0x4 - core index']
  #allocation1 [shape = 'u32[144,128]{1,0:T(1,128)}', space=vmem, size = 0x12000, scoped, tag = 'internal scratch']
  #allocation2 [shape = 'f32[8,128]{1,0:T(8,128)}', space=vmem, size = 0x1000, scoped, tag = 'scratch operand']
  %s0 = inlined_call_operand.vmem [shape: bf16[8,8], index: 0, kind: input, shape index: {}]
  %s1 = inlined_call_operand.vmem [shape: bf16[8,128], index: 1, kind: input, shape index: {}, may-alias: {1,2}]
  %s2 = inlined_call_operand.vmem [shape: bf16[8,128], index: 2, kind: input, shape index: {}, may-alias: {1,2}]
  %s3 = inlined_call_operand.vmem [shape: bf16[256,128], index: 3, kind: input, shape index: {}]
  %s4 = inlined_call_operand.vmem [shape: f32[1,128], index: 4, kind: input, shape index: {}]
  %s5 = inlined_call_operand.vmem [shape: bf16[128,128], index: 5, kind: input, shape index: {}]
  %s6 = inlined_call_operand.vmem [shape: f32[1,128], index: 6, kind: input, shape index: {}]
  %s7 = inlined_call_operand.vmem [shape: f32[8,128], index: 7, kind: output, shape index: {}]
  %s8 = sld [smem:[#allocation0]]
  $region46: #{gqnn_forward.3} parent=0
    _
  %s10 = ssub.s32 1, %s8
  %s11 = scalar_select 0, %s10, %s8
  // Predicated region
  $region2: #{gqnn_forward.3} parent=0 // pred_check
    _
  $region3: #{gqnn_forward.3} parent=0 // pred_check_branch
    %13 = sbr.rel (0) target = $region5
  $region4: #{gqnn_forward.3} parent=0 // pred_region
    _
  $region5: #{gqnn_forward.3} parent=0 // pred_fallthru
    _
  // Predicated region
  $region6: #{gqnn_forward.3} parent=0 // pred_check
    _
  $region7: #{gqnn_forward.3} parent=0 // pred_check_branch
    %15 = sbr.rel (0) target = $region9
  $region8: #{gqnn_forward.3} parent=0 // pred_region
    _
  $region9: #{gqnn_forward.3} parent=0 // pred_fallthru
    _
  // Predicated region
  $region10: #{gqnn_forward.3} parent=0 // pred_check
    _
  $region11: #{gqnn_forward.3} parent=0 // pred_check_branch
    %17 = sbr.rel (0) target = $region13
  $region12: #{gqnn_forward.3} parent=0 // pred_region
    _
  $region13: #{gqnn_forward.3} parent=0 // pred_fallthru
    _
  // Predicated region
  $region14: #{gqnn_forward.3} parent=0 // pred_check
    _
  $region15: #{gqnn_forward.3} parent=0 // pred_check_branch
    %19 = sbr.rel (0) target = $region17
  $region16: #{gqnn_forward.3} parent=0 // pred_region
    _
  $region17: #{gqnn_forward.3} parent=0 // pred_fallthru
    _
  // Predicated region
  $region18: #{gqnn_forward.3} parent=0 // pred_check
    _
  $region19: #{gqnn_forward.3} parent=0 // pred_check_branch
    %21 = sbr.rel (0) target = $region21
  $region20: #{gqnn_forward.3} parent=0 // pred_region
    _
  $region21: #{gqnn_forward.3} parent=0 // pred_fallthru
    _
  // Predicated region
  $region22: #{gqnn_forward.3} parent=0 // pred_check
    _
  $region23: #{gqnn_forward.3} parent=0 // pred_check_branch
    %23 = sbr.rel (0) target = $region25
  $region24: #{gqnn_forward.3} parent=0 // pred_region
    _
  $region25: #{gqnn_forward.3} parent=0 // pred_fallthru
    _
  // Predicated region
  $region26: #{gqnn_forward.3} parent=0 // pred_check
    _
  $region27: #{gqnn_forward.3} parent=0 // pred_check_branch
    %25 = sbr.rel (0) target = $region29
  $region28: #{gqnn_forward.3} parent=0 // pred_region
    _
  $region29: #{gqnn_forward.3} parent=0 // pred_fallthru
    _
  %p27 = scmp.eq.s32.totalorder 0, 0
  // Predicated region
  $region30: #{gqnn_forward.3} parent=0 // pred_check
    %p28 = pneg %p27
  $region31: #{gqnn_forward.3} parent=0 // pred_check_branch
    %30 = sbr.rel (%p28) target = $region33
  $region32: #{gqnn_forward.3} parent=0 // pred_region
    %31 = vst [vmem:[#allocation2] sm:$0xff] 0.0
  $region33: #{gqnn_forward.3} parent=0 // pred_fallthru
    _
  %v32 = vld [vmem:[#allocation2] sm:$0xff]
  %v33 = vld [vmem:[%s0] sm:$0xf]
  %v34 = vld [vmem:[%s1] sm:$0xf]
  %vm35 = vcmask 64512
  %v37 = vsel %vm35, %v33, 0
  %vm39 = vcmask 1043456
  %v41 = vsel %vm39, %v34, 0
  %43 = vmatprep.subr.bf16.mxu0 0
  %44 = vmatpush1.bf16.msra.mxu0 0
  %45 = vmatprep.subr.bf16.mxu0 0
  %46 = vmatpush1.bf16.msra.mxu0 0
  %47 = vmatprep.subr.bf16.mxu0 0
  %48 = vmatpush1.bf16.msra.mxu0 0
  %49 = vmatprep.subr.bf16.mxu0 0
  %50 = vmatpush1.bf16.msra.mxu0 0
  %51 = vmatprep.subr.bf16.mxu0 0
  %52 = vmatpush1.bf16.msra.mxu0 0
  %53 = vmatprep.subr.bf16.mxu0 0
  %54 = vmatpush1.bf16.msra.mxu0 0
  %55 = vmatprep.subr.bf16.mxu0 0
  %56 = vmatpush1.bf16.msra.mxu0 0
  %57 = vmatprep.subr.bf16.mxu0 0
  %58 = vmatpush1.bf16.msra.mxu0 %v41
  %59 = vmatprep.subr.bf16.mxu0 0
  %60 = vmatpush2.bf16.msra.mxu0 0
  %61 = vmatprep.subr.bf16.mxu0 0
  %62 = vmatpush2.bf16.msra.mxu0 0
  %63 = vmatprep.subr.bf16.mxu0 0
  %64 = vmatpush2.bf16.msra.mxu0 0
  %65 = vmatprep.subr.bf16.mxu0 0
  %66 = vmatpush2.bf16.msra.mxu0 0
  %67 = vmatprep.subr.bf16.mxu0 0
  %68 = vmatpush2.bf16.msra.mxu0 0
  %69 = vmatprep.subr.bf16.mxu0 0
  %70 = vmatpush2.bf16.msra.mxu0 0
  %71 = vmatprep.subr.bf16.mxu0 0
  %72 = vmatpush2.bf16.msra.mxu0 0
  %73 = vmatprep.subr.bf16.mxu0 0
  %74 = vmatpush2.bf16.msra.mxu0 0
  %75 = vmatprep.mubr.bf16.mxu0 0
  %76 = vmatmul.mubr.bf16.gmra.mxu0 %v37
  %v77 = vpop.f32.mrf.mxu0
  %v78 = vadd.f32 0.0, %v77
  %v79 = vpop.f32.mrf.mxu0
  %v80 = vpop.f32.mrf.mxu0
  %v81 = vpop.f32.mrf.mxu0
  %82 = vdwg.mxu0
  %v83 = vadd.f32 %v32, %v78
  %84 = vst [vmem:[#allocation2] sm:$0xff] %v83
  // Predicated region
  $region34: #{gqnn_forward.3} parent=0 // pred_check
    %p85 = pneg %p27
  $region35: #{gqnn_forward.3} parent=0 // pred_check_branch
    %87 = sbr.rel (%p85) target = $region37
  $region36: #{gqnn_forward.3} parent=0 // pred_region
    %v88 = vld [vmem:[#allocation2] sm:$0xff]
    %v89 = vpack.c.bf16 %v88, %v88
    %v90 = vld [vmem:[%s2] sm:$0xf]
    %v91 = vld [vmem:[%s3] sm:$0xf]
    %v92 = vld [vmem:[%s3 + $0x4] sm:$0xf]
    %v93 = vld [vmem:[%s3 + $0x8] sm:$0xf]
    %v94 = vld [vmem:[%s3 + $0xc] sm:$0xf]
    %v95 = vld [vmem:[%s3 + $0x10] sm:$0xf]
    %v96 = vld [vmem:[%s3 + $0x14] sm:$0xf]
    %v97 = vld [vmem:[%s3 + $0x18] sm:$0xf]
    %v98 = vld [vmem:[%s3 + $0x1c] sm:$0xf]
    %v99 = vld [vmem:[%s3 + $0x20] sm:$0xf]
    %v100 = vld [vmem:[%s3 + $0x24] sm:$0xf]
    %v101 = vld [vmem:[%s3 + $0x28] sm:$0xf]
    %v102 = vld [vmem:[%s3 + $0x2c] sm:$0xf]
    %v103 = vld [vmem:[%s3 + $0x30] sm:$0xf]
    %v104 = vld [vmem:[%s3 + $0x34] sm:$0xf]
    %v105 = vld [vmem:[%s3 + $0x38] sm:$0xf]
    %v106 = vld [vmem:[%s3 + $0x3c] sm:$0xf]
    %v107 = vld [vmem:[%s3 + $0x40] sm:$0xf]
    %v108 = vld [vmem:[%s3 + $0x44] sm:$0xf]
    %v109 = vld [vmem:[%s3 + $0x48] sm:$0xf]
    %v110 = vld [vmem:[%s3 + $0x4c] sm:$0xf]
    %v111 = vld [vmem:[%s3 + $0x50] sm:$0xf]
    %v112 = vld [vmem:[%s3 + $0x54] sm:$0xf]
    %v113 = vld [vmem:[%s3 + $0x58] sm:$0xf]
    %v114 = vld [vmem:[%s3 + $0x5c] sm:$0xf]
    %v115 = vld [vmem:[%s3 + $0x60] sm:$0xf]
    %v116 = vld [vmem:[%s3 + $0x64] sm:$0xf]
    %v117 = vld [vmem:[%s3 + $0x68] sm:$0xf]
    %v118 = vld [vmem:[%s3 + $0x6c] sm:$0xf]
    %v119 = vld [vmem:[%s3 + $0x70] sm:$0xf]
    %v120 = vld [vmem:[%s3 + $0x74] sm:$0xf]
    %v121 = vld [vmem:[%s3 + $0x78] sm:$0xf]
    %v122 = vld [vmem:[%s3 + $0x7c] sm:$0xf]
    %v123 = vld [vmem:[%s4] sm:$0x1]
    %v125 = vlaneseq
    %v126 = vshrl.u32 %v125, 7
    %v127 = vsub.s32 0, %v126
    %v128 = vrot.slane %v123, %v127
    %v162 = vunpack.c.l.b16 %v91
    %v163 = vunpack.c.l.b16 %v92
    %v164 = vunpack.c.l.b16 %v93
    %v165 = vunpack.c.l.b16 %v94
    %v166 = vunpack.c.l.b16 %v95
    %v167 = vunpack.c.l.b16 %v96
    %v168 = vunpack.c.l.b16 %v97
    %v169 = vunpack.c.l.b16 %v98
    %v170 = vunpack.c.l.b16 %v99
    %v171 = vunpack.c.l.b16 %v100
    %v172 = vunpack.c.l.b16 %v101
    %v173 = vunpack.c.l.b16 %v102
    %v174 = vunpack.c.l.b16 %v103
    %v175 = vunpack.c.l.b16 %v104
    %v176 = vunpack.c.l.b16 %v105
    %v177 = vunpack.c.l.b16 %v106
    %v178 = vunpack.c.l.b16 %v107
    %v179 = vunpack.c.l.b16 %v108
    %v180 = vunpack.c.l.b16 %v109
    %v181 = vunpack.c.l.b16 %v110
    %v182 = vunpack.c.l.b16 %v111
    %v183 = vunpack.c.l.b16 %v112
    %v184 = vunpack.c.l.b16 %v113
    %v185 = vunpack.c.l.b16 %v114
    %v186 = vunpack.c.l.b16 %v115
    %v187 = vunpack.c.l.b16 %v116
    %v188 = vunpack.c.l.b16 %v117
    %v189 = vunpack.c.l.b16 %v118
    %v190 = vunpack.c.l.b16 %v119
    %v191 = vunpack.c.l.b16 %v120
    %v192 = vunpack.c.l.b16 %v121
    %v193 = vunpack.c.l.b16 %v122
    %v194 = vpack.c.b16 %v163, %v162
    %v195 = vpack.c.b16 %v165, %v164
    %v196 = vpack.c.b16 %v167, %v166
    %v197 = vpack.c.b16 %v169, %v168
    %v198 = vpack.c.b16 %v171, %v170
    %v199 = vpack.c.b16 %v173, %v172
    %v200 = vpack.c.b16 %v175, %v174
    %v201 = vpack.c.b16 %v177, %v176
    %v202 = vpack.c.b16 %v179, %v178
    %v203 = vpack.c.b16 %v181, %v180
    %v204 = vpack.c.b16 %v183, %v182
    %v205 = vpack.c.b16 %v185, %v184
    %v206 = vpack.c.b16 %v187, %v186
    %v207 = vpack.c.b16 %v189, %v188
    %v208 = vpack.c.b16 %v191, %v190
    %v209 = vpack.c.b16 %v193, %v192
    %226 = vmatprep.subr.bf16.mxu0 0
    %227 = vmatpush1.bf16.msra.mxu0 %v201
    %228 = vmatprep.subr.bf16.mxu0 0
    %229 = vmatpush1.bf16.msra.mxu0 %v200
    %230 = vmatprep.subr.bf16.mxu0 0
    %231 = vmatpush1.bf16.msra.mxu0 %v199
    %232 = vmatprep.subr.bf16.mxu0 0
    %233 = vmatpush1.bf16.msra.mxu0 %v198
    %234 = vmatprep.subr.bf16.mxu0 0
    %235 = vmatpush1.bf16.msra.mxu0 %v197
    %236 = vmatprep.subr.bf16.mxu0 0
    %237 = vmatpush1.bf16.msra.mxu0 %v196
    %238 = vmatprep.subr.bf16.mxu0 0
    %239 = vmatpush1.bf16.msra.mxu0 %v195
    %240 = vmatprep.subr.bf16.mxu0 0
    %241 = vmatpush1.bf16.msra.mxu0 %v194
    %242 = vmatprep.subr.bf16.mxu0 0
    %243 = vmatpush2.bf16.msra.mxu0 %v209
    %244 = vmatprep.subr.bf16.mxu0 0
    %245 = vmatpush2.bf16.msra.mxu0 %v208
    %246 = vmatprep.subr.bf16.mxu0 0
    %247 = vmatpush2.bf16.msra.mxu0 %v207
    %248 = vmatprep.subr.bf16.mxu0 0
    %249 = vmatpush2.bf16.msra.mxu0 %v206
    %250 = vmatprep.subr.bf16.mxu0 0
    %251 = vmatpush2.bf16.msra.mxu0 %v205
    %252 = vmatprep.subr.bf16.mxu0 0
    %253 = vmatpush2.bf16.msra.mxu0 %v204
    %254 = vmatprep.subr.bf16.mxu0 0
    %255 = vmatpush2.bf16.msra.mxu0 %v203
    %256 = vmatprep.subr.bf16.mxu0 0
    %257 = vmatpush2.bf16.msra.mxu0 %v202
    %258 = vmatprep.mubr.bf16.mxu0 %v90
    %259 = vmatmul.mubr.bf16.gmra.mxu0 %v89
    %v260 = vpop.f32.mrf.mxu0
    %v261 = vadd.f32 %v128, %v260
    %v262 = vpop.f32.mrf.mxu0
    %v263 = vpop.f32.mrf.mxu0
    %v264 = vpop.f32.mrf.mxu0
    %265 = vdwg.mxu0
    %v266 = vmax.f32 %v261, 0.0
    %v267 = vpack.c.bf16 %v266, %v266
    %v268 = vld [vmem:[%s5] sm:$0xf]
    %v269 = vld [vmem:[%s5 + $0x4] sm:$0xf]
    %v270 = vld [vmem:[%s5 + $0x8] sm:$0xf]
    %v271 = vld [vmem:[%s5 + $0xc] sm:$0xf]
    %v272 = vld [vmem:[%s5 + $0x10] sm:$0xf]
    %v273 = vld [vmem:[%s5 + $0x14] sm:$0xf]
    %v274 = vld [vmem:[%s5 + $0x18] sm:$0xf]
    %v275 = vld [vmem:[%s5 + $0x1c] sm:$0xf]
    %v276 = vld [vmem:[%s5 + $0x20] sm:$0xf]
    %v277 = vld [vmem:[%s5 + $0x24] sm:$0xf]
    %v278 = vld [vmem:[%s5 + $0x28] sm:$0xf]
    %v279 = vld [vmem:[%s5 + $0x2c] sm:$0xf]
    %v280 = vld [vmem:[%s5 + $0x30] sm:$0xf]
    %v281 = vld [vmem:[%s5 + $0x34] sm:$0xf]
    %v282 = vld [vmem:[%s5 + $0x38] sm:$0xf]
    %v283 = vld [vmem:[%s5 + $0x3c] sm:$0xf]
    %v284 = vld [vmem:[%s6] sm:$0x1]
    %v286 = vlaneseq
    %v287 = vshrl.u32 %v286, 7
    %v288 = vsub.s32 0, %v287
    %v289 = vrot.slane %v284, %v288
    %v307 = vunpack.c.l.b16 %v268
    %v308 = vunpack.c.l.b16 %v269
    %v309 = vunpack.c.l.b16 %v270
    %v310 = vunpack.c.l.b16 %v271
    %v311 = vunpack.c.l.b16 %v272
    %v312 = vunpack.c.l.b16 %v273
    %v313 = vunpack.c.l.b16 %v274
    %v314 = vunpack.c.l.b16 %v275
    %v315 = vunpack.c.l.b16 %v276
    %v316 = vunpack.c.l.b16 %v277
    %v317 = vunpack.c.l.b16 %v278
    %v318 = vunpack.c.l.b16 %v279
    %v319 = vunpack.c.l.b16 %v280
    %v320 = vunpack.c.l.b16 %v281
    %v321 = vunpack.c.l.b16 %v282
    %v322 = vunpack.c.l.b16 %v283
    %v323 = vpack.c.b16 %v308, %v307
    %v324 = vpack.c.b16 %v310, %v309
    %v325 = vpack.c.b16 %v312, %v311
    %v326 = vpack.c.b16 %v314, %v313
    %v327 = vpack.c.b16 %v316, %v315
    %v328 = vpack.c.b16 %v318, %v317
    %v329 = vpack.c.b16 %v320, %v319
    %v330 = vpack.c.b16 %v322, %v321
    %339 = vmatprep.subr.bf16.mxu0 0
    %340 = vmatpush1.bf16.msra.mxu0 %v330
    %341 = vmatprep.subr.bf16.mxu0 0
    %342 = vmatpush1.bf16.msra.mxu0 %v329
    %343 = vmatprep.subr.bf16.mxu0 0
    %344 = vmatpush1.bf16.msra.mxu0 %v328
    %345 = vmatprep.subr.bf16.mxu0 0
    %346 = vmatpush1.bf16.msra.mxu0 %v327
    %347 = vmatprep.subr.bf16.mxu0 0
    %348 = vmatpush1.bf16.msra.mxu0 %v326
    %349 = vmatprep.subr.bf16.mxu0 0
    %350 = vmatpush1.bf16.msra.mxu0 %v325
    %351 = vmatprep.subr.bf16.mxu0 0
    %352 = vmatpush1.bf16.msra.mxu0 %v324
    %353 = vmatprep.subr.bf16.mxu0 0
    %354 = vmatpush1.bf16.msra.mxu0 %v323
    %355 = vmatprep.subr.bf16.mxu0 0
    %356 = vmatpush2.bf16.msra.mxu0 0
    %357 = vmatprep.subr.bf16.mxu0 0
    %358 = vmatpush2.bf16.msra.mxu0 0
    %359 = vmatprep.subr.bf16.mxu0 0
    %360 = vmatpush2.bf16.msra.mxu0 0
    %361 = vmatprep.subr.bf16.mxu0 0
    %362 = vmatpush2.bf16.msra.mxu0 0
    %363 = vmatprep.subr.bf16.mxu0 0
    %364 = vmatpush2.bf16.msra.mxu0 0
    %365 = vmatprep.subr.bf16.mxu0 0
    %366 = vmatpush2.bf16.msra.mxu0 0
    %367 = vmatprep.subr.bf16.mxu0 0
    %368 = vmatpush2.bf16.msra.mxu0 0
    %369 = vmatprep.subr.bf16.mxu0 0
    %370 = vmatpush2.bf16.msra.mxu0 0
    %371 = vmatprep.mubr.bf16.mxu0 0
    %372 = vmatmul.mubr.bf16.gmra.mxu0 %v267
    %v373 = vpop.f32.mrf.mxu0
    %v374 = vadd.f32 %v289, %v373
    %v375 = vpop.f32.mrf.mxu0
    %v376 = vpop.f32.mrf.mxu0
    %v377 = vpop.f32.mrf.mxu0
    %378 = vdwg.mxu0
    %379 = vst [vmem:[%s7] sm:$0xff] %v374
  $region37: #{gqnn_forward.3} parent=0 // pred_fallthru
    _
  // Predicated region
  $region38: #{gqnn_forward.3} parent=0 // pred_check
    _
  $region39: #{gqnn_forward.3} parent=0 // pred_check_branch
    %381 = sbr.rel (0) target = $region41
  $region40: #{gqnn_forward.3} parent=0 // pred_region
    _
  $region41: #{gqnn_forward.3} parent=0 // pred_fallthru
    _
  // Predicated region
  $region42: #{gqnn_forward.3} parent=0 // pred_check
    _
  $region43: #{gqnn_forward.3} parent=0 // pred_check_branch
    %383 = sbr.rel (0) target = $region45
  $region44: #{gqnn_forward.3} parent=0 // pred_region
    _
  $region45: #{gqnn_forward.3} parent=0 // pred_fallthru
    _

// kernel: gqnn_forward.2
$region0: #{gqnn_forward.2}
  #allocation0 [shape = 'u32[]', space=smem, size = 0x4, offset = 0x4, fixed_abs, tag = 'smem constant byte address 0x4 - core index']
  #allocation1 [shape = 'u32[144,128]{1,0:T(1,128)}', space=vmem, size = 0x12000, scoped, tag = 'internal scratch']
  #allocation2 [shape = 'f32[8,128]{1,0:T(8,128)}', space=vmem, size = 0x1000, scoped, tag = 'scratch operand']
  %s0 = inlined_call_operand.vmem [shape: bf16[8,8], index: 0, kind: input, shape index: {}]
  %s1 = inlined_call_operand.vmem [shape: bf16[8,128], index: 1, kind: input, shape index: {}, may-alias: {1,2}]
  %s2 = inlined_call_operand.vmem [shape: bf16[8,128], index: 2, kind: input, shape index: {}, may-alias: {1,2}]
  %s3 = inlined_call_operand.vmem [shape: bf16[256,128], index: 3, kind: input, shape index: {}]
  %s4 = inlined_call_operand.vmem [shape: f32[1,128], index: 4, kind: input, shape index: {}]
  %s5 = inlined_call_operand.vmem [shape: bf16[8,128], index: 5, kind: output, shape index: {}]
  %s6 = sld [smem:[#allocation0]]
  $region38: #{gqnn_forward.2} parent=0
    _
  %s8 = ssub.s32 1, %s6
  %s9 = scalar_select 0, %s8, %s6
  // Predicated region
  $region2: #{gqnn_forward.2} parent=0 // pred_check
    _
  $region3: #{gqnn_forward.2} parent=0 // pred_check_branch
    %11 = sbr.rel (0) target = $region5
  $region4: #{gqnn_forward.2} parent=0 // pred_region
    _
  $region5: #{gqnn_forward.2} parent=0 // pred_fallthru
    _
  // Predicated region
  $region6: #{gqnn_forward.2} parent=0 // pred_check
    _
  $region7: #{gqnn_forward.2} parent=0 // pred_check_branch
    %13 = sbr.rel (0) target = $region9
  $region8: #{gqnn_forward.2} parent=0 // pred_region
    _
  $region9: #{gqnn_forward.2} parent=0 // pred_fallthru
    _
  // Predicated region
  $region10: #{gqnn_forward.2} parent=0 // pred_check
    _
  $region11: #{gqnn_forward.2} parent=0 // pred_check_branch
    %15 = sbr.rel (0) target = $region13
  $region12: #{gqnn_forward.2} parent=0 // pred_region
    _
  $region13: #{gqnn_forward.2} parent=0 // pred_fallthru
    _
  // Predicated region
  $region14: #{gqnn_forward.2} parent=0 // pred_check
    _
  $region15: #{gqnn_forward.2} parent=0 // pred_check_branch
    %17 = sbr.rel (0) target = $region17
  $region16: #{gqnn_forward.2} parent=0 // pred_region
    _
  $region17: #{gqnn_forward.2} parent=0 // pred_fallthru
    _
  // Predicated region
  $region18: #{gqnn_forward.2} parent=0 // pred_check
    _
  $region19: #{gqnn_forward.2} parent=0 // pred_check_branch
    %19 = sbr.rel (0) target = $region21
  $region20: #{gqnn_forward.2} parent=0 // pred_region
    _
  $region21: #{gqnn_forward.2} parent=0 // pred_fallthru
    _
  %p21 = scmp.eq.s32.totalorder 0, 0
  // Predicated region
  $region22: #{gqnn_forward.2} parent=0 // pred_check
    %p22 = pneg %p21
  $region23: #{gqnn_forward.2} parent=0 // pred_check_branch
    %24 = sbr.rel (%p22) target = $region25
  $region24: #{gqnn_forward.2} parent=0 // pred_region
    %25 = vst [vmem:[#allocation2] sm:$0xff] 0.0
  $region25: #{gqnn_forward.2} parent=0 // pred_fallthru
    _
  %v26 = vld [vmem:[#allocation2] sm:$0xff]
  %v27 = vld [vmem:[%s0] sm:$0xf]
  %v28 = vld [vmem:[%s1] sm:$0xf]
  %vm29 = vcmask 64512
  %v31 = vsel %vm29, %v27, 0
  %vm33 = vcmask 1043456
  %v35 = vsel %vm33, %v28, 0
  %37 = vmatprep.subr.bf16.mxu0 0
  %38 = vmatpush1.bf16.msra.mxu0 0
  %39 = vmatprep.subr.bf16.mxu0 0
  %40 = vmatpush1.bf16.msra.mxu0 0
  %41 = vmatprep.subr.bf16.mxu0 0
  %42 = vmatpush1.bf16.msra.mxu0 0
  %43 = vmatprep.subr.bf16.mxu0 0
  %44 = vmatpush1.bf16.msra.mxu0 0
  %45 = vmatprep.subr.bf16.mxu0 0
  %46 = vmatpush1.bf16.msra.mxu0 0
  %47 = vmatprep.subr.bf16.mxu0 0
  %48 = vmatpush1.bf16.msra.mxu0 0
  %49 = vmatprep.subr.bf16.mxu0 0
  %50 = vmatpush1.bf16.msra.mxu0 0
  %51 = vmatprep.subr.bf16.mxu0 0
  %52 = vmatpush1.bf16.msra.mxu0 %v35
  %53 = vmatprep.subr.bf16.mxu0 0
  %54 = vmatpush2.bf16.msra.mxu0 0
  %55 = vmatprep.subr.bf16.mxu0 0
  %56 = vmatpush2.bf16.msra.mxu0 0
  %57 = vmatprep.subr.bf16.mxu0 0
  %58 = vmatpush2.bf16.msra.mxu0 0
  %59 = vmatprep.subr.bf16.mxu0 0
  %60 = vmatpush2.bf16.msra.mxu0 0
  %61 = vmatprep.subr.bf16.mxu0 0
  %62 = vmatpush2.bf16.msra.mxu0 0
  %63 = vmatprep.subr.bf16.mxu0 0
  %64 = vmatpush2.bf16.msra.mxu0 0
  %65 = vmatprep.subr.bf16.mxu0 0
  %66 = vmatpush2.bf16.msra.mxu0 0
  %67 = vmatprep.subr.bf16.mxu0 0
  %68 = vmatpush2.bf16.msra.mxu0 0
  %69 = vmatprep.mubr.bf16.mxu0 0
  %70 = vmatmul.mubr.bf16.gmra.mxu0 %v31
  %v71 = vpop.f32.mrf.mxu0
  %v72 = vadd.f32 0.0, %v71
  %v73 = vpop.f32.mrf.mxu0
  %v74 = vpop.f32.mrf.mxu0
  %v75 = vpop.f32.mrf.mxu0
  %76 = vdwg.mxu0
  %v77 = vadd.f32 %v26, %v72
  %78 = vst [vmem:[#allocation2] sm:$0xff] %v77
  // Predicated region
  $region26: #{gqnn_forward.2} parent=0 // pred_check
    %p79 = pneg %p21
  $region27: #{gqnn_forward.2} parent=0 // pred_check_branch
    %81 = sbr.rel (%p79) target = $region29
  $region28: #{gqnn_forward.2} parent=0 // pred_region
    %v82 = vld [vmem:[#allocation2] sm:$0xff]
    %v83 = vpack.c.bf16 %v82, %v82
    %v84 = vld [vmem:[%s2] sm:$0xf]
    %v85 = vld [vmem:[%s3] sm:$0xf]
    %v86 = vld [vmem:[%s3 + $0x4] sm:$0xf]
    %v87 = vld [vmem:[%s3 + $0x8] sm:$0xf]
    %v88 = vld [vmem:[%s3 + $0xc] sm:$0xf]
    %v89 = vld [vmem:[%s3 + $0x10] sm:$0xf]
    %v90 = vld [vmem:[%s3 + $0x14] sm:$0xf]
    %v91 = vld [vmem:[%s3 + $0x18] sm:$0xf]
    %v92 = vld [vmem:[%s3 + $0x1c] sm:$0xf]
    %v93 = vld [vmem:[%s3 + $0x20] sm:$0xf]
    %v94 = vld [vmem:[%s3 + $0x24] sm:$0xf]
    %v95 = vld [vmem:[%s3 + $0x28] sm:$0xf]
    %v96 = vld [vmem:[%s3 + $0x2c] sm:$0xf]
    %v97 = vld [vmem:[%s3 + $0x30] sm:$0xf]
    %v98 = vld [vmem:[%s3 + $0x34] sm:$0xf]
    %v99 = vld [vmem:[%s3 + $0x38] sm:$0xf]
    %v100 = vld [vmem:[%s3 + $0x3c] sm:$0xf]
    %v101 = vld [vmem:[%s3 + $0x40] sm:$0xf]
    %v102 = vld [vmem:[%s3 + $0x44] sm:$0xf]
    %v103 = vld [vmem:[%s3 + $0x48] sm:$0xf]
    %v104 = vld [vmem:[%s3 + $0x4c] sm:$0xf]
    %v105 = vld [vmem:[%s3 + $0x50] sm:$0xf]
    %v106 = vld [vmem:[%s3 + $0x54] sm:$0xf]
    %v107 = vld [vmem:[%s3 + $0x58] sm:$0xf]
    %v108 = vld [vmem:[%s3 + $0x5c] sm:$0xf]
    %v109 = vld [vmem:[%s3 + $0x60] sm:$0xf]
    %v110 = vld [vmem:[%s3 + $0x64] sm:$0xf]
    %v111 = vld [vmem:[%s3 + $0x68] sm:$0xf]
    %v112 = vld [vmem:[%s3 + $0x6c] sm:$0xf]
    %v113 = vld [vmem:[%s3 + $0x70] sm:$0xf]
    %v114 = vld [vmem:[%s3 + $0x74] sm:$0xf]
    %v115 = vld [vmem:[%s3 + $0x78] sm:$0xf]
    %v116 = vld [vmem:[%s3 + $0x7c] sm:$0xf]
    %v117 = vld [vmem:[%s4] sm:$0x1]
    %v119 = vlaneseq
    %v120 = vshrl.u32 %v119, 7
    %v121 = vsub.s32 0, %v120
    %v122 = vrot.slane %v117, %v121
    %v156 = vunpack.c.l.b16 %v85
    %v157 = vunpack.c.l.b16 %v86
    %v158 = vunpack.c.l.b16 %v87
    %v159 = vunpack.c.l.b16 %v88
    %v160 = vunpack.c.l.b16 %v89
    %v161 = vunpack.c.l.b16 %v90
    %v162 = vunpack.c.l.b16 %v91
    %v163 = vunpack.c.l.b16 %v92
    %v164 = vunpack.c.l.b16 %v93
    %v165 = vunpack.c.l.b16 %v94
    %v166 = vunpack.c.l.b16 %v95
    %v167 = vunpack.c.l.b16 %v96
    %v168 = vunpack.c.l.b16 %v97
    %v169 = vunpack.c.l.b16 %v98
    %v170 = vunpack.c.l.b16 %v99
    %v171 = vunpack.c.l.b16 %v100
    %v172 = vunpack.c.l.b16 %v101
    %v173 = vunpack.c.l.b16 %v102
    %v174 = vunpack.c.l.b16 %v103
    %v175 = vunpack.c.l.b16 %v104
    %v176 = vunpack.c.l.b16 %v105
    %v177 = vunpack.c.l.b16 %v106
    %v178 = vunpack.c.l.b16 %v107
    %v179 = vunpack.c.l.b16 %v108
    %v180 = vunpack.c.l.b16 %v109
    %v181 = vunpack.c.l.b16 %v110
    %v182 = vunpack.c.l.b16 %v111
    %v183 = vunpack.c.l.b16 %v112
    %v184 = vunpack.c.l.b16 %v113
    %v185 = vunpack.c.l.b16 %v114
    %v186 = vunpack.c.l.b16 %v115
    %v187 = vunpack.c.l.b16 %v116
    %v188 = vpack.c.b16 %v157, %v156
    %v189 = vpack.c.b16 %v159, %v158
    %v190 = vpack.c.b16 %v161, %v160
    %v191 = vpack.c.b16 %v163, %v162
    %v192 = vpack.c.b16 %v165, %v164
    %v193 = vpack.c.b16 %v167, %v166
    %v194 = vpack.c.b16 %v169, %v168
    %v195 = vpack.c.b16 %v171, %v170
    %v196 = vpack.c.b16 %v173, %v172
    %v197 = vpack.c.b16 %v175, %v174
    %v198 = vpack.c.b16 %v177, %v176
    %v199 = vpack.c.b16 %v179, %v178
    %v200 = vpack.c.b16 %v181, %v180
    %v201 = vpack.c.b16 %v183, %v182
    %v202 = vpack.c.b16 %v185, %v184
    %v203 = vpack.c.b16 %v187, %v186
    %220 = vmatprep.subr.bf16.mxu0 0
    %221 = vmatpush1.bf16.msra.mxu0 %v195
    %222 = vmatprep.subr.bf16.mxu0 0
    %223 = vmatpush1.bf16.msra.mxu0 %v194
    %224 = vmatprep.subr.bf16.mxu0 0
    %225 = vmatpush1.bf16.msra.mxu0 %v193
    %226 = vmatprep.subr.bf16.mxu0 0
    %227 = vmatpush1.bf16.msra.mxu0 %v192
    %228 = vmatprep.subr.bf16.mxu0 0
    %229 = vmatpush1.bf16.msra.mxu0 %v191
    %230 = vmatprep.subr.bf16.mxu0 0
    %231 = vmatpush1.bf16.msra.mxu0 %v190
    %232 = vmatprep.subr.bf16.mxu0 0
    %233 = vmatpush1.bf16.msra.mxu0 %v189
    %234 = vmatprep.subr.bf16.mxu0 0
    %235 = vmatpush1.bf16.msra.mxu0 %v188
    %236 = vmatprep.subr.bf16.mxu0 0
    %237 = vmatpush2.bf16.msra.mxu0 %v203
    %238 = vmatprep.subr.bf16.mxu0 0
    %239 = vmatpush2.bf16.msra.mxu0 %v202
    %240 = vmatprep.subr.bf16.mxu0 0
    %241 = vmatpush2.bf16.msra.mxu0 %v201
    %242 = vmatprep.subr.bf16.mxu0 0
    %243 = vmatpush2.bf16.msra.mxu0 %v200
    %244 = vmatprep.subr.bf16.mxu0 0
    %245 = vmatpush2.bf16.msra.mxu0 %v199
    %246 = vmatprep.subr.bf16.mxu0 0
    %247 = vmatpush2.bf16.msra.mxu0 %v198
    %248 = vmatprep.subr.bf16.mxu0 0
    %249 = vmatpush2.bf16.msra.mxu0 %v197
    %250 = vmatprep.subr.bf16.mxu0 0
    %251 = vmatpush2.bf16.msra.mxu0 %v196
    %252 = vmatprep.mubr.bf16.mxu0 %v84
    %253 = vmatmul.mubr.bf16.gmra.mxu0 %v83
    %v254 = vpop.f32.mrf.mxu0
    %v255 = vadd.f32 %v122, %v254
    %v256 = vpop.f32.mrf.mxu0
    %v257 = vpop.f32.mrf.mxu0
    %v258 = vpop.f32.mrf.mxu0
    %259 = vdwg.mxu0
    %v260 = vmax.f32 %v255, 0.0
    %v261 = vpack.c.bf16 %v260, %v260
    %262 = vst [vmem:[%s5] sm:$0xf] %v261
  $region29: #{gqnn_forward.2} parent=0 // pred_fallthru
    _
  // Predicated region
  $region30: #{gqnn_forward.2} parent=0 // pred_check
    _
  $region31: #{gqnn_forward.2} parent=0 // pred_check_branch
    %264 = sbr.rel (0) target = $region33
  $region32: #{gqnn_forward.2} parent=0 // pred_region
    _
  $region33: #{gqnn_forward.2} parent=0 // pred_fallthru
    _
  // Predicated region
  $region34: #{gqnn_forward.2} parent=0 // pred_check
    _
  $region35: #{gqnn_forward.2} parent=0 // pred_check_branch
    %266 = sbr.rel (0) target = $region37
  $region36: #{gqnn_forward.2} parent=0 // pred_region
    _
  $region37: #{gqnn_forward.2} parent=0 // pred_fallthru
    _

</llo_original>
